<compile_context>
chip_gen: v5e
topology: v5e:2x2
jax: 0.10.0
libtpu: 0.0.40
codegen_flags: <defaults>
</compile_context>

<pallas_src>
import functools

import jax
import jax.numpy as jnp
from jax.experimental import pallas as pl
from jax.experimental.pallas import tpu as pltpu


def _round_up(n, m):
    return ((n + m - 1) // m) * m


def _cdiv(a, b):
    return (a + b - 1) // b


def _sigmoid_f32(z):
    # sigmoid(z) = 0.5 * tanh(z/2) + 0.5 -> single EUP transcendental per
    # element (tanh), no divide / approx-reciprocal in the epilogue.
    return 0.5 * jnp.tanh(0.5 * z) + 0.5


def _mlp_kernel(x_ref, w1_ref, b1_ref, w2_ref, b2_ref, o_ref):
    # Cast the streamed activation tile to the MXU dtype in-kernel; the
    # wrapper never materializes a padded bf16 copy of x in HBM.
    x = x_ref[...].astype(w1_ref.dtype)
    # layer 1: MXU matmul, f32 accumulation; bias + sigmoid in f32 (v5e-safe)
    h = jnp.dot(x, w1_ref[...], preferred_element_type=jnp.float32)
    h = _sigmoid_f32(h + b1_ref[...])
    # layer 2: feed h back to the MXU in the weight dtype
    y = jnp.dot(h.astype(w2_ref.dtype), w2_ref[...],
                preferred_element_type=jnp.float32)
    o_ref[...] = _sigmoid_f32(y + b2_ref[...]).astype(o_ref.dtype)


@functools.partial(jax.jit,
                   static_argnames=("block_batch", "mxu_dtype", "lane_mult"))
def my_model_forward(x, w1, b1, w2, b2, *, block_batch=512,
                     mxu_dtype=jnp.bfloat16, lane_mult=128):
    """y = sigmoid(sigmoid(x @ w1 + b1) @ w2 + b2)."""
    batch, in_features = x.shape
    hidden = w1.shape[1]
    out_features = w2.shape[1]
    out_dtype = x.dtype

    # ---- lane-dense padding for weight/output feature axes -----------------
    # TODO(synk): on v6e/v7x a 256 multiple better feeds the 2x256x256 MXU for
    # large layers; 128 is already the floor for this 32-wide model.
    hid_p = _round_up(hidden, lane_mult)
    out_p = _round_up(out_features, lane_mult)

    # ---- batch tiling: pad only to a multiple of 8, cap padding waste ------
    TARGET_STEPS = 4          # >=2 grid steps so v7x's two TCs both get work
    MIN_TILE = 128            # amortize ~0.35us/step grid overhead
    batch_p8 = _round_up(batch, 8)
    tb = min(block_batch, batch_p8,
             max(MIN_TILE, _round_up(_cdiv(batch_p8, TARGET_STEPS), 8)))
    num_tiles = _cdiv(batch_p8, tb)
    batch_p = num_tiles * tb

    # x: batch-dim pad only when strictly needed (no feature pad, no cast).
    if batch_p != batch:
        x_in = jnp.zeros((batch_p, in_features), x.dtype).at[:batch, :].set(x)
    else:
        x_in = x

    # Weights/biases: one-time, tiny relative to activations. Zero padding
    # keeps real outputs exact: padded hidden columns leave the first sigmoid
    # as 0.5 but only multiply zero rows of padded w2.
    w1p = jnp.zeros((in_features, hid_p), mxu_dtype).at[:, :hidden].set(
        w1.astype(mxu_dtype))
    w2p = jnp.zeros((hid_p, out_p), mxu_dtype).at[:hidden, :out_features].set(
        w2.astype(mxu_dtype))
    b1p = jnp.zeros((1, hid_p), jnp.float32).at[:, :hidden].set(
        b1.reshape(1, -1).astype(jnp.float32))
    b2p = jnp.zeros((1, out_p), jnp.float32).at[:, :out_features].set(
        b2.reshape(1, -1).astype(jnp.float32))

    # ---- VMEM budget (explicit, covers v5e's 16 MiB scoped default) --------
    w_itemsize = jnp.dtype(mxu_dtype).itemsize
    x_itemsize = jnp.dtype(x.dtype).itemsize
    o_itemsize = jnp.dtype(out_dtype).itemsize
    weight_bytes = (in_features * hid_p + hid_p * out_p) * w_itemsize
    bias_bytes = (hid_p + out_p) * 4
    x_tile_bytes = tb * in_features * x_itemsize
    out_tile_bytes = tb * out_p * o_itemsize
    inter_bytes = tb * hid_p * (4 + w_itemsize) + tb * out_p * 4
    # Pallas double-buffers every input/output block by default.
    needed = (2 * (weight_bytes + bias_bytes + x_tile_bytes + out_tile_bytes)
              + inter_bytes)
    vmem_limit = min(64 << 20, max(16 << 20, int(needed * 3) + (1 << 20)))
    if 2 * (weight_bytes + bias_bytes) > (48 << 20):
        # TODO(synk): add a feature-axis-tiled fallback (grid over hid/out with
        # an f32 accumulator scratch) for layers too large to hold resident in
        # v7x's 64 MiB VMEM.
        raise ValueError("weights too large to hold resident in VMEM")

    grid = (batch_p // tb,)
    flops = 2 * batch_p * (in_features * hid_p + hid_p * out_p)
    bytes_accessed = (batch_p * in_features * x_itemsize
                      + weight_bytes + bias_bytes
                      + batch_p * out_p * o_itemsize)

    out_padded = pl.pallas_call(
        _mlp_kernel,
        out_shape=jax.ShapeDtypeStruct((batch_p, out_p), out_dtype),
        grid=grid,
        in_specs=[
            # x: streamed, unpadded features (block last dim == full array dim)
            pl.BlockSpec((tb, in_features), lambda i: (i, 0)),
            pl.BlockSpec((in_features, hid_p), lambda i: (0, 0)),  # w1 resident
            pl.BlockSpec((1, hid_p), lambda i: (0, 0)),            # b1 resident
            pl.BlockSpec((hid_p, out_p), lambda i: (0, 0)),        # w2 resident
            pl.BlockSpec((1, out_p), lambda i: (0, 0)),            # b2 resident
        ],
        out_specs=pl.BlockSpec((tb, out_p), lambda i: (i, 0)),     # lane-dense
        compiler_params=pltpu.CompilerParams(
            dimension_semantics=("parallel",),
            vmem_limit_bytes=vmem_limit),
        cost_estimate=pl.CostEstimate(
            flops=flops,
            transcendentals=batch_p * (hid_p + out_p),   # 1 tanh per element
            bytes_accessed=bytes_accessed),
    )(x_in, w1p, b1p, w2p, b2p)

    return out_padded[:batch, :out_features]


def _reference_forward(x, w1, b1, w2, b2):
    h = jax.nn.sigmoid(x @ w1 + b1.reshape(1, -1))
    return jax.nn.sigmoid(h @ w2 + b2.reshape(1, -1))


def init_params(key, input_size, output_size, dtype=jnp.float32):
    """Deterministic init matching nn.Linear's U(-1/sqrt(fan_in), 1/sqrt(fan_in))."""
    k1, k2, k3, k4 = jax.random.split(key, 4)
    bound1 = 1.0 / (input_size ** 0.5)
    bound2 = 1.0 / (output_size ** 0.5)
    # stored as (in_features, out_features) — see layout comment above
    w1 = jax.random.uniform(k1, (input_size, output_size), dtype, -bound1, bound1)
    b1 = jax.random.uniform(k2, (output_size,), dtype, -bound1, bound1)
    w2 = jax.random.uniform(k3, (output_size, output_size), dtype, -bound2, bound2)
    b2 = jax.random.uniform(k4, (output_size,), dtype, -bound2, bound2)
    return w1, b1, w2, b2


if __name__ == "__main__":
    input_size, output_size, batch = 32, 32, 8

    key = jax.random.PRNGKey(0)
    pkey, xkey = jax.random.split(key)
    w1, b1, w2, b2 = init_params(pkey, input_size, output_size)
    x = jax.random.normal(xkey, (batch, input_size), jnp.float32)

    out = my_model_forward(x, w1, b1, w2, b2)
    out = jax.block_until_ready(out)

    # mirror the module's diagnostic prints (host-side, not in-kernel)
    print(f"\tIn model: input size: {x.shape}")
    print(f"\t          output size: {out.shape}")

    # correctness vs. pure-JAX f32 reference (bf16 MXU tolerance)
    ref = _reference_forward(x, w1, b1, w2, b2)
    assert out.shape == (batch, output_size)
    assert out.dtype == x.dtype
    max_err = float(jnp.max(jnp.abs(out - ref)))
    assert max_err < 2e-2, f"max abs error {max_err}"
    print("KERNEL_OK")
</pallas_src>

<mosaic_0001>
module attributes {stable_mosaic.version = 11 : i64} {
  func.func @_mlp_kernel(%arg0: i32, %arg1: memref<8x32xf32, #tpu.memory_space<vmem>>, %arg2: memref<32x128xbf16, #tpu.memory_space<vmem>>, %arg3: memref<1x128xf32, #tpu.memory_space<vmem>>, %arg4: memref<128x128xbf16, #tpu.memory_space<vmem>>, %arg5: memref<1x128xf32, #tpu.memory_space<vmem>>, %arg6: memref<8x128xf32, #tpu.memory_space<vmem>>) attributes {dimension_semantics = [#tpu.dimension_semantics<parallel>], iteration_bounds = array<i64: 1>, scalar_prefetch = 0 : i64, scratch_operands = 0 : i64, tpu.core_type = #tpu.core_type<tc>, window_params = [{transform_indices = @transform_0, window_bounds = array<i64: 8, 32>}, {pipeline_mode = #tpu.pipeline_mode<synchronous>, transform_indices = @transform_1, window_bounds = array<i64: 32, 128>}, {pipeline_mode = #tpu.pipeline_mode<synchronous>, transform_indices = @transform_2, window_bounds = array<i64: 1, 128>}, {pipeline_mode = #tpu.pipeline_mode<synchronous>, transform_indices = @transform_3, window_bounds = array<i64: 128, 128>}, {pipeline_mode = #tpu.pipeline_mode<synchronous>, transform_indices = @transform_4, window_bounds = array<i64: 1, 128>}, {transform_indices = @transform_5, window_bounds = array<i64: 8, 128>}]} {
    %c0 = arith.constant 0 : index
    %c0_0 = arith.constant 0 : index
    %0 = vector.load %arg1[%c0, %c0_0] : memref<8x32xf32, #tpu.memory_space<vmem>>, vector<8x32xf32>
    %1 = arith.truncf %0 : vector<8x32xf32> to vector<8x32xbf16>
    %c0_1 = arith.constant 0 : index
    %c0_2 = arith.constant 0 : index
    %2 = vector.load %arg2[%c0_1, %c0_2] : memref<32x128xbf16, #tpu.memory_space<vmem>>, vector<32x128xbf16>
    %cst = arith.constant dense<0.000000e+00> : vector<8x128xf32>
    %3 = tpu.matmul %1, %2, %cst {dimension_numbers = #tpu.dot_dimension_numbers<[1], [0], [0], [1], [0, 0, 1, 1], [], []>} : vector<8x32xbf16>, vector<32x128xbf16>, vector<8x128xf32> -> vector<8x128xf32>
    %c0_3 = arith.constant 0 : index
    %c0_4 = arith.constant 0 : index
    %4 = vector.load %arg3[%c0_3, %c0_4] : memref<1x128xf32, #tpu.memory_space<vmem>>, vector<1x128xf32>
    %5 = vector.broadcast %4 : vector<1x128xf32> to vector<8x128xf32>
    %6 = arith.addf %3, %5 : vector<8x128xf32>
    %cst_5 = arith.constant 5.000000e-01 : f32
    %7 = vector.broadcast %cst_5 : f32 to vector<8x128xf32>
    %8 = arith.mulf %7, %6 : vector<8x128xf32>
    %9 = math.tanh %8 : vector<8x128xf32>
    %cst_6 = arith.constant 5.000000e-01 : f32
    %10 = vector.broadcast %cst_6 : f32 to vector<8x128xf32>
    %11 = arith.mulf %10, %9 : vector<8x128xf32>
    %cst_7 = arith.constant 5.000000e-01 : f32
    %12 = vector.broadcast %cst_7 : f32 to vector<8x128xf32>
    %13 = arith.addf %11, %12 : vector<8x128xf32>
    %14 = arith.truncf %13 : vector<8x128xf32> to vector<8x128xbf16>
    %c0_8 = arith.constant 0 : index
    %c0_9 = arith.constant 0 : index
    %15 = vector.load %arg4[%c0_8, %c0_9] : memref<128x128xbf16, #tpu.memory_space<vmem>>, vector<128x128xbf16>
    %cst_10 = arith.constant dense<0.000000e+00> : vector<8x128xf32>
    %16 = tpu.matmul %14, %15, %cst_10 {dimension_numbers = #tpu.dot_dimension_numbers<[1], [0], [0], [1], [0, 0, 1, 1], [], []>} : vector<8x128xbf16>, vector<128x128xbf16>, vector<8x128xf32> -> vector<8x128xf32>
    %c0_11 = arith.constant 0 : index
    %c0_12 = arith.constant 0 : index
    %17 = vector.load %arg5[%c0_11, %c0_12] : memref<1x128xf32, #tpu.memory_space<vmem>>, vector<1x128xf32>
    %18 = vector.broadcast %17 : vector<1x128xf32> to vector<8x128xf32>
    %19 = arith.addf %16, %18 : vector<8x128xf32>
    %cst_13 = arith.constant 5.000000e-01 : f32
    %20 = vector.broadcast %cst_13 : f32 to vector<8x128xf32>
    %21 = arith.mulf %20, %19 : vector<8x128xf32>
    %22 = math.tanh %21 : vector<8x128xf32>
    %cst_14 = arith.constant 5.000000e-01 : f32
    %23 = vector.broadcast %cst_14 : f32 to vector<8x128xf32>
    %24 = arith.mulf %23, %22 : vector<8x128xf32>
    %cst_15 = arith.constant 5.000000e-01 : f32
    %25 = vector.broadcast %cst_15 : f32 to vector<8x128xf32>
    %26 = arith.addf %24, %25 : vector<8x128xf32>
    %c0_16 = arith.constant 0 : index
    %c0_17 = arith.constant 0 : index
    %27 = vector.load %arg6[%c0_16, %c0_17] : memref<8x128xf32, #tpu.memory_space<vmem>>, vector<8x128xf32>
    tpu.vector_store %arg6[%c0_16, %c0_17], %26 {strides = array<i32>} : memref<8x128xf32, #tpu.memory_space<vmem>>, vector<8x128xf32>,
    return
  }
  func.func @transform_0(%arg0: i32) -> (i32, i32) {
    %c0_i32 = arith.constant 0 : i32
    %c0_i32_0 = arith.constant 0 : i32
    return %arg0, %c0_i32 : i32, i32
  }
  func.func @transform_1(%arg0: i32) -> (i32, i32) {
    %c0_i32 = arith.constant 0 : i32
    %c0_i32_0 = arith.constant 0 : i32
    %c0_i32_1 = arith.constant 0 : i32
    return %c0_i32, %c0_i32_0 : i32, i32
  }
  func.func @transform_2(%arg0: i32) -> (i32, i32) {
    %c0_i32 = arith.constant 0 : i32
    %c0_i32_0 = arith.constant 0 : i32
    %c0_i32_1 = arith.constant 0 : i32
    return %c0_i32, %c0_i32_0 : i32, i32
  }
  func.func @transform_3(%arg0: i32) -> (i32, i32) {
    %c0_i32 = arith.constant 0 : i32
    %c0_i32_0 = arith.constant 0 : i32
    %c0_i32_1 = arith.constant 0 : i32
    return %c0_i32, %c0_i32_0 : i32, i32
  }
  func.func @transform_4(%arg0: i32) -> (i32, i32) {
    %c0_i32 = arith.constant 0 : i32
    %c0_i32_0 = arith.constant 0 : i32
    %c0_i32_1 = arith.constant 0 : i32
    return %c0_i32, %c0_i32_0 : i32, i32
  }
  func.func @transform_5(%arg0: i32) -> (i32, i32) {
    %c0_i32 = arith.constant 0 : i32
    %c0_i32_0 = arith.constant 0 : i32
    return %arg0, %c0_i32 : i32, i32
  }
}

</mosaic_0001>

<llo_original>
// kernel: my_model_forward.1
$region0: #{my_model_forward.1}
  #allocation0 [shape = 'u32[]', space=smem, size = 0x4, offset = 0x4, fixed_abs, tag = 'smem constant byte address 0x4 - core index']
  #allocation1 [shape = 'u32[72,128]{1,0:T(1,128)}', space=vmem, size = 0x9000, scoped, tag = 'internal scratch']
  %s0 = inlined_call_operand.vmem [shape: f32[8,32], index: 0, kind: input, shape index: {}]
  %s1 = inlined_call_operand.vmem [shape: bf16[32,128], index: 1, kind: input, shape index: {}]
  %s2 = inlined_call_operand.vmem [shape: f32[1,128], index: 2, kind: input, shape index: {}]
  %s3 = inlined_call_operand.vmem [shape: bf16[128,128], index: 3, kind: input, shape index: {}]
  %s4 = inlined_call_operand.vmem [shape: f32[1,128], index: 4, kind: input, shape index: {}]
  %s5 = inlined_call_operand.hbm [shape: f32[8,128], index: 5, kind: output, shape index: {}]
  %s6 = sld [smem:[#allocation0]]
  $region30: #{my_model_forward.1} parent=0
    _
  %s8 = ssub.s32 1, %s6
  %s9 = scalar_select 0, %s8, %s6
  $region1: #{my_model_forward.1} parent=0
    #allocation2 [shape = 'u8[4096]{0}', space=vmem, size = 0x1000, scoped, tag = 'output window, operand 0, single buffered']
    #allocation3 [shape = 's32[1]{0}', space=sflag, size = 0x4, scoped, tag = 'scoped memory for my_model_forward.1']
    %10 = vsyncpa [#allocation3], 0
    // Predicated region
    $region2: #{my_model_forward.1} parent=1 // pred_check
      _
    $region3: #{my_model_forward.1} parent=1 // pred_check_branch
      %12 = sbr.rel (0) target = $region5
    $region4: #{my_model_forward.1} parent=1 // pred_region
      _
    $region5: #{my_model_forward.1} parent=1 // pred_fallthru
      _
    // Predicated region
    $region6: #{my_model_forward.1} parent=1 // pred_check
      _
    $region7: #{my_model_forward.1} parent=1 // pred_check_branch
      %14 = sbr.rel (0) target = $region9
    $region8: #{my_model_forward.1} parent=1 // pred_region
      _
    $region9: #{my_model_forward.1} parent=1 // pred_fallthru
      _
    // Predicated region
    $region10: #{my_model_forward.1} parent=1 // pred_check
      _
    $region11: #{my_model_forward.1} parent=1 // pred_check_branch
      %16 = sbr.rel (0) target = $region13
    $region12: #{my_model_forward.1} parent=1 // pred_region
      _
    $region13: #{my_model_forward.1} parent=1 // pred_fallthru
      _
    // Predicated region
    $region14: #{my_model_forward.1} parent=1 // pred_check
      _
    $region15: #{my_model_forward.1} parent=1 // pred_check_branch
      %18 = sbr.rel (0) target = $region17
    $region16: #{my_model_forward.1} parent=1 // pred_region
      _
    $region17: #{my_model_forward.1} parent=1 // pred_fallthru
      _
    // Predicated region
    $region18: #{my_model_forward.1} parent=1 // pred_check
      _
    $region19: #{my_model_forward.1} parent=1 // pred_check_branch
      %20 = sbr.rel (0) target = $region21
    $region20: #{my_model_forward.1} parent=1 // pred_region
      _
    $region21: #{my_model_forward.1} parent=1 // pred_fallthru
      _
    %v22 = vld [vmem:[%s0] sm:$0xff]
    %v23 = vpack.c.bf16 %v22, %v22
    %v24 = vld [vmem:[%s1] sm:$0xf]
    %v25 = vld [vmem:[%s1 + $0x4] sm:$0xf]
    %v26 = vld [vmem:[%s1 + $0x8] sm:$0xf]
    %v27 = vld [vmem:[%s1 + $0xc] sm:$0xf]
    %v28 = vld [vmem:[%s2] sm:$0x1]
    %v30 = vperm.slane %v28, 0
    %v36 = vunpack.c.l.b16 %v24
    %v37 = vunpack.c.l.b16 %v25
    %v38 = vunpack.c.l.b16 %v26
    %v39 = vunpack.c.l.b16 %v27
    %v40 = vpack.c.b16 %v37, %v36
    %v41 = vpack.c.b16 %v39, %v38
    %vm44 = vcmask 261120
    %v46 = vsel %vm44, %v23, 0
    %48 = vmatpush.bf16.msra.mxu0 0
    %49 = vmatpush.bf16.msra.mxu0 0
    %50 = vmatpush.bf16.msra.mxu0 0
    %51 = vmatpush.bf16.msra.mxu0 0
    %52 = vmatpush.bf16.msra.mxu0 0
    %53 = vmatpush.bf16.msra.mxu0 0
    %54 = vmatpush.bf16.msra.mxu0 %v41
    %55 = vmatpush.bf16.msra.mxu0 %v40
    %56 = vmatmul.bf16.gmra.mxu0 %v46
    %v57 = vpop.f32.mrf.mxu0
    %v58 = vadd.f32 %v30, %v57
    %v59 = vpop.f32.mrf.mxu0
    %60 = vdwg.mxu0
    %v61 = vmul.f32 %v58, 0.5
    %v62 = vtanh.pop %v61
    %v63 = vmul.f32 %v62, 0.5
    %v64 = vadd.f32 %v63, 0.5
    %v65 = vpack.c.bf16 %v64, %v64
    %v66 = vld [vmem:[%s3] sm:$0xf]
    %v67 = vld [vmem:[%s3 + $0x4] sm:$0xf]
    %v68 = vld [vmem:[%s3 + $0x8] sm:$0xf]
    %v69 = vld [vmem:[%s3 + $0xc] sm:$0xf]
    %v70 = vld [vmem:[%s3 + $0x10] sm:$0xf]
    %v71 = vld [vmem:[%s3 + $0x14] sm:$0xf]
    %v72 = vld [vmem:[%s3 + $0x18] sm:$0xf]
    %v73 = vld [vmem:[%s3 + $0x1c] sm:$0xf]
    %v74 = vld [vmem:[%s3 + $0x20] sm:$0xf]
    %v75 = vld [vmem:[%s3 + $0x24] sm:$0xf]
    %v76 = vld [vmem:[%s3 + $0x28] sm:$0xf]
    %v77 = vld [vmem:[%s3 + $0x2c] sm:$0xf]
    %v78 = vld [vmem:[%s3 + $0x30] sm:$0xf]
    %v79 = vld [vmem:[%s3 + $0x34] sm:$0xf]
    %v80 = vld [vmem:[%s3 + $0x38] sm:$0xf]
    %v81 = vld [vmem:[%s3 + $0x3c] sm:$0xf]
    %v82 = vld [vmem:[%s4] sm:$0x1]
    %v84 = vperm.slane %v82, 0
    %v102 = vunpack.c.l.b16 %v66
    %v103 = vunpack.c.l.b16 %v67
    %v104 = vunpack.c.l.b16 %v68
    %v105 = vunpack.c.l.b16 %v69
    %v106 = vunpack.c.l.b16 %v70
    %v107 = vunpack.c.l.b16 %v71
    %v108 = vunpack.c.l.b16 %v72
    %v109 = vunpack.c.l.b16 %v73
    %v110 = vunpack.c.l.b16 %v74
    %v111 = vunpack.c.l.b16 %v75
    %v112 = vunpack.c.l.b16 %v76
    %v113 = vunpack.c.l.b16 %v77
    %v114 = vunpack.c.l.b16 %v78
    %v115 = vunpack.c.l.b16 %v79
    %v116 = vunpack.c.l.b16 %v80
    %v117 = vunpack.c.l.b16 %v81
    %v118 = vpack.c.b16 %v103, %v102
    %v119 = vpack.c.b16 %v105, %v104
    %v120 = vpack.c.b16 %v107, %v106
    %v121 = vpack.c.b16 %v109, %v108
    %v122 = vpack.c.b16 %v111, %v110
    %v123 = vpack.c.b16 %v113, %v112
    %v124 = vpack.c.b16 %v115, %v114
    %v125 = vpack.c.b16 %v117, %v116
    %134 = vmatpush.bf16.msra.mxu0 %v125
    %135 = vmatpush.bf16.msra.mxu0 %v124
    %136 = vmatpush.bf16.msra.mxu0 %v123
    %137 = vmatpush.bf16.msra.mxu0 %v122
    %138 = vmatpush.bf16.msra.mxu0 %v121
    %139 = vmatpush.bf16.msra.mxu0 %v120
    %140 = vmatpush.bf16.msra.mxu0 %v119
    %141 = vmatpush.bf16.msra.mxu0 %v118
    %142 = vmatmul.bf16.gmra.mxu0 %v65
    %v143 = vpop.f32.mrf.mxu0
    %v144 = vadd.f32 %v84, %v143
    %v145 = vpop.f32.mrf.mxu0
    %146 = vdwg.mxu0
    %v147 = vmul.f32 %v144, 0.5
    %v148 = vtanh.pop %v147
    %v149 = vmul.f32 %v148, 0.5
    %v150 = vadd.f32 %v149, 0.5
    %151 = vst [vmem:[#allocation2] sm:$0xff] %v150
    // Predicated region
    $region22: #{my_model_forward.1} parent=1 // pred_check
      _
    $region23: #{my_model_forward.1} parent=1 // pred_check_branch
      %153 = sbr.rel (0) target = $region25
    $region24: #{my_model_forward.1} parent=1 // pred_region
      %155 = vsyncadd [#allocation3], 0
      %s157 = sshll.u32 [#allocation2], 4
      %s158 = int_to_ptr.vmem [resolvable:$true] %s157
      %s159 = sshll.u32 %s5, 4
      %s160 = int_to_ptr.hbm [resolvable:$true] %s159
      %162 = dma.vmem_to_hbm [thread:$0]  %s158, 128, %s160, [#allocation3]
    $region25: #{my_model_forward.1} parent=1 // pred_fallthru
      _
    // Predicated region
    $region26: #{my_model_forward.1} parent=1 // pred_check
      _
    $region27: #{my_model_forward.1} parent=1 // pred_check_branch
      %164 = sbr.rel (0) target = $region29
    $region28: #{my_model_forward.1} parent=1 // pred_region
      %166 = dma.done [#allocation3], 128
    $region29: #{my_model_forward.1} parent=1 // pred_fallthru
      _
    %167 = vsyncpa [#allocation3], 1

</llo_original>
